<compile_context>
chip_gen: v6e
topology: v6e:2x2x1
jax: 0.10.0
libtpu: 0.0.40
codegen_flags: <defaults>
</compile_context>

<pallas_src>
import jax
import jax.numpy as jnp
from jax.experimental import pallas as pl
from jax.experimental.pallas import tpu as pltpu


def _make_tied_projection_kernel(has_bias: bool, k_rem: int):
    """Build the kernel body. `k_rem` != 0 means the last K block is partial."""

    def kernel(*refs):
        if has_bias:
            x_ref, w_ref, b_ref, o_ref, acc_ref = refs
        else:
            x_ref, w_ref, o_ref, acc_ref = refs
            b_ref = None

        k = pl.program_id(2)
        nk = pl.num_programs(2)

        @pl.when(k == 0)
        def _():
            acc_ref[...] = jnp.zeros_like(acc_ref)

        x = x_ref[...]  # (tm, tk)
        w = w_ref[...]  # (tn, tk)
        if k_rem:
            # Zero the out-of-bounds tail of BOTH operands on the last (partial)
            # K block so padding garbage (which may be NaN/Inf) cannot reach the
            # accumulator.  Static no-op when K divides the tile evenly.
            limit = jnp.where(k == nk - 1, k_rem, x.shape[1])
            col_x = jax.lax.broadcasted_iota(jnp.int32, x.shape, 1)
            col_w = jax.lax.broadcasted_iota(jnp.int32, w.shape, 1)
            x = jnp.where(col_x < limit, x, jnp.zeros_like(x))
            w = jnp.where(col_w < limit, w, jnp.zeros_like(w))

        # (tm, tk) x (tn, tk) contracted on K -> (tm, tn); no transpose needed.
        acc_ref[...] += jax.lax.dot_general(
            x,
            w,
            dimension_numbers=(((1,), (1,)), ((), ())),
            preferred_element_type=jnp.float32,
        )

        @pl.when(k == nk - 1)
        def _():
            acc = acc_ref[...]
            if has_bias:
                acc = acc + b_ref[...].astype(jnp.float32)
            o_ref[...] = acc.astype(o_ref.dtype)

    return kernel


def tied_projection(x, weight, bias=None, *, tm=256, tn=512, tk=512):
    """Pallas equivalent of fairseq2 TiedProjection.forward (F.linear semantics)."""
    out_dim, in_dim = weight.shape
    orig_shape = x.shape
    assert orig_shape[-1] == in_dim, "last dim of x must equal input_dim"

    x2d = x.reshape(-1, in_dim)
    M = x2d.shape[0]

    # Tile selection: use the full dimension when it is small (block shape equal to
    # the array dim satisfies the (8,128) rule), else the aligned preferred tile.
    tm_ = M if M <= tm else tm              # tm multiple of 8 when tiled
    tn_ = out_dim if out_dim <= tn else tn  # tn multiple of 128 when tiled
    tk_ = in_dim if in_dim <= tk else tk    # tk multiple of 128 when tiled

    nm = pl.cdiv(M, tm_)
    nn = pl.cdiv(out_dim, tn_)
    nk = pl.cdiv(in_dim, tk_)
    k_rem = in_dim % tk_  # 0 -> no in-kernel K-tail masking generated

    in_specs = [
        pl.BlockSpec((tm_, tk_), lambda i, j, k: (i, k)),   # x tile
        pl.BlockSpec((tn_, tk_), lambda i, j, k: (j, k)),   # weight tile (N, K)
    ]
    args = [x2d, weight]
    if bias is not None:
        in_specs.append(pl.BlockSpec((1, tn_), lambda i, j, k: (0, j)))
        args.append(bias.reshape(1, out_dim))

    itemsize = x2d.dtype.itemsize
    cost = pl.CostEstimate(
        flops=2 * M * out_dim * in_dim,
        transcendentals=0,
        bytes_accessed=(
            M * in_dim * itemsize
            + out_dim * in_dim * weight.dtype.itemsize
            + M * out_dim * itemsize
            + (out_dim * bias.dtype.itemsize if bias is not None else 0)
        ),
    )

    out = pl.pallas_call(
        _make_tied_projection_kernel(bias is not None, k_rem),
        out_shape=jax.ShapeDtypeStruct((M, out_dim), x.dtype),
        grid_spec=pltpu.PrefetchScalarGridSpec(
            num_scalar_prefetch=0,
            grid=(nm, nn, nk),
            in_specs=in_specs,
            out_specs=pl.BlockSpec((tm_, tn_), lambda i, j, k: (i, j)),
            scratch_shapes=[pltpu.VMEM((tm_, tn_), jnp.float32)],
        ),
        compiler_params=pltpu.CompilerParams(
            dimension_semantics=("parallel", "parallel", "arbitrary"),
        ),
        cost_estimate=cost,
    )(*args)

    return out.reshape(*orig_shape[:-1], out_dim)


if __name__ == "__main__":
    key = jax.random.PRNGKey(0)
    kx, kw, kb, kx2, kw2 = jax.random.split(key, 5)

    # Small shapes consistent with the module: (*, H_in) -> (*, H_out)
    batch, seq, hidden, out_dim = 2, 8, 32, 48
    x = jax.random.normal(kx, (batch, seq, hidden), dtype=jnp.float32)
    weight = jax.random.normal(kw, (out_dim, hidden), dtype=jnp.float32) * 0.05
    bias = jax.random.normal(kb, (out_dim,), dtype=jnp.float32) * 0.01

    y = jax.block_until_ready(tied_projection(x, weight, bias))
    y_ref = x @ weight.T + bias
    assert y.shape == (batch, seq, out_dim)
    assert jnp.allclose(y, y_ref, atol=1e-5, rtol=1e-5)

    # No-bias path.
    y_nb = jax.block_until_ready(tied_projection(x, weight, None))
    assert jnp.allclose(y_nb, x @ weight.T, atol=1e-5, rtol=1e-5)

    # Exercise M/K tiling with partial edge blocks (M=300 not multiple of tm,
    # K=640 not multiple of tk -> in-kernel masking of BOTH x and weight K tails).
    x2 = jax.random.normal(kx2, (4, 75, 640), dtype=jnp.float32)
    w2 = jax.random.normal(kw2, (384, 640), dtype=jnp.float32) * 0.02
    y2 = jax.block_until_ready(tied_projection(x2, w2, None))
    assert jnp.allclose(y2, x2 @ w2.T, atol=1e-4, rtol=1e-4)

    # bf16 path with f32 accumulation.
    xb = x.astype(jnp.bfloat16)
    wb = weight.astype(jnp.bfloat16)
    yb = jax.block_until_ready(tied_projection(xb, wb, bias.astype(jnp.bfloat16)))
    yb_ref = (xb.astype(jnp.float32) @ wb.astype(jnp.float32).T
              + bias.astype(jnp.bfloat16).astype(jnp.float32))
    assert jnp.allclose(yb.astype(jnp.float32), yb_ref, atol=2e-2, rtol=2e-2)

    print("KERNEL_OK")
</pallas_src>

<mosaic_0001>
module attributes {stable_mosaic.version = 11 : i64} {
  func.func @kernel(%arg0: i32, %arg1: i32, %arg2: i32, %arg3: memref<16x32xf32, #tpu.memory_space<vmem>>, %arg4: memref<48x32xf32, #tpu.memory_space<vmem>>, %arg5: memref<1x48xf32, #tpu.memory_space<vmem>>, %arg6: memref<16x48xf32, #tpu.memory_space<vmem>>, %arg7: memref<16x48xf32, #tpu.memory_space<vmem>>) attributes {dimension_semantics = [#tpu.dimension_semantics<parallel>, #tpu.dimension_semantics<parallel>, #tpu.dimension_semantics<arbitrary>], iteration_bounds = array<i64: 1, 1, 1>, scalar_prefetch = 0 : i64, scratch_operands = 1 : i64, tpu.core_type = #tpu.core_type<tc>, window_params = [{transform_indices = @transform_0, window_bounds = array<i64: 16, 32>}, {transform_indices = @transform_1, window_bounds = array<i64: 48, 32>}, {transform_indices = @transform_2, window_bounds = array<i64: 1, 48>}, {transform_indices = @transform_3, window_bounds = array<i64: 16, 48>}]} {
    %c0_i32 = arith.constant 0 : i32
    %0 = arith.cmpi eq, %arg2, %c0_i32 : i32
    %1 = arith.extui %0 : i1 to i32
    %c0_i32_0 = arith.constant 0 : i32
    %2 = arith.cmpi ne, %1, %c0_i32_0 : i32
    scf.if %2 {
      %cst_10 = arith.constant 0.000000e+00 : f32
      %12 = vector.broadcast %cst_10 : f32 to vector<16x48xf32>
      %c0_11 = arith.constant 0 : index
      %c0_12 = arith.constant 0 : index
      %13 = vector.load %arg7[%c0_11, %c0_12] : memref<16x48xf32, #tpu.memory_space<vmem>>, vector<16x48xf32>
      tpu.vector_store %arg7[%c0_11, %c0_12], %12 {strides = array<i32>} : memref<16x48xf32, #tpu.memory_space<vmem>>, vector<16x48xf32>,
    } else {
    }
    %c0 = arith.constant 0 : index
    %c0_1 = arith.constant 0 : index
    %3 = vector.load %arg3[%c0, %c0_1] : memref<16x32xf32, #tpu.memory_space<vmem>>, vector<16x32xf32>
    %c0_2 = arith.constant 0 : index
    %c0_3 = arith.constant 0 : index
    %4 = vector.load %arg4[%c0_2, %c0_3] : memref<48x32xf32, #tpu.memory_space<vmem>>, vector<48x32xf32>
    %c0_4 = arith.constant 0 : index
    %c0_5 = arith.constant 0 : index
    %5 = vector.load %arg7[%c0_4, %c0_5] : memref<16x48xf32, #tpu.memory_space<vmem>>, vector<16x48xf32>
    %cst = arith.constant dense<0.000000e+00> : vector<16x48xf32>
    %6 = tpu.matmul %3, %4, %cst {dimension_numbers = #tpu.dot_dimension_numbers<[1], [1], [0], [0], [0, 0, 1, 0], [], []>} : vector<16x32xf32>, vector<48x32xf32>, vector<16x48xf32> -> vector<16x48xf32>
    %7 = arith.addf %5, %6 : vector<16x48xf32>
    %c0_6 = arith.constant 0 : index
    %c0_7 = arith.constant 0 : index
    %8 = vector.load %arg7[%c0_6, %c0_7] : memref<16x48xf32, #tpu.memory_space<vmem>>, vector<16x48xf32>
    tpu.vector_store %arg7[%c0_6, %c0_7], %7 {strides = array<i32>} : memref<16x48xf32, #tpu.memory_space<vmem>>, vector<16x48xf32>,
    %c0_i32_8 = arith.constant 0 : i32
    %9 = arith.cmpi eq, %arg2, %c0_i32_8 : i32
    %10 = arith.extui %9 : i1 to i32
    %c0_i32_9 = arith.constant 0 : i32
    %11 = arith.cmpi ne, %10, %c0_i32_9 : i32
    scf.if %11 {
      %c0_10 = arith.constant 0 : index
      %c0_11 = arith.constant 0 : index
      %12 = vector.load %arg7[%c0_10, %c0_11] : memref<16x48xf32, #tpu.memory_space<vmem>>, vector<16x48xf32>
      %c0_12 = arith.constant 0 : index
      %c0_13 = arith.constant 0 : index
      %13 = vector.load %arg5[%c0_12, %c0_13] : memref<1x48xf32, #tpu.memory_space<vmem>>, vector<1x48xf32>
      %14 = vector.broadcast %13 : vector<1x48xf32> to vector<16x48xf32>
      %15 = arith.addf %12, %14 : vector<16x48xf32>
      %c0_14 = arith.constant 0 : index
      %c0_15 = arith.constant 0 : index
      %16 = vector.load %arg6[%c0_14, %c0_15] : memref<16x48xf32, #tpu.memory_space<vmem>>, vector<16x48xf32>
      tpu.vector_store %arg6[%c0_14, %c0_15], %15 {strides = array<i32>} : memref<16x48xf32, #tpu.memory_space<vmem>>, vector<16x48xf32>,
    } else {
    }
    return
  }
  func.func @transform_0(%arg0: i32, %arg1: i32, %arg2: i32) -> (i32, i32) {
    %c0_i32 = arith.constant 0 : i32
    return %arg0, %arg2 : i32, i32
  }
  func.func @transform_1(%arg0: i32, %arg1: i32, %arg2: i32) -> (i32, i32) {
    %c0_i32 = arith.constant 0 : i32
    return %arg1, %arg2 : i32, i32
  }
  func.func @transform_2(%arg0: i32, %arg1: i32, %arg2: i32) -> (i32, i32) {
    %c0_i32 = arith.constant 0 : i32
    %c0_i32_0 = arith.constant 0 : i32
    return %c0_i32, %arg1 : i32, i32
  }
  func.func @transform_3(%arg0: i32, %arg1: i32, %arg2: i32) -> (i32, i32) {
    %c0_i32 = arith.constant 0 : i32
    return %arg0, %arg1 : i32, i32
  }
}

</mosaic_0001>

<llo_original>
// kernel: tpu_custom_call.1
$region0: #{tpu_custom_call.1}
  #allocation0 [shape = 'u32[]', space=smem, size = 0x4, offset = 0x4, fixed_abs, tag = 'smem constant byte address 0x4 - core index']
  #allocation1 [shape = 'u32[144,128]{1,0:T(1,128)}', space=vmem, size = 0x12000, scoped, tag = 'internal scratch']
  #allocation2 [shape = 'f32[16,48]{1,0:T(8,128)}', space=vmem, size = 0x2000, scoped, tag = 'scratch operand']
  %s0 = inlined_call_operand.vmem [shape: f32[16,32], index: 0, kind: input, shape index: {}]
  %s1 = inlined_call_operand.vmem [shape: f32[48,32], index: 1, kind: input, shape index: {}]
  %s2 = inlined_call_operand.vmem [shape: f32[1,48], index: 2, kind: input, shape index: {}]
  %s3 = inlined_call_operand.hbm [shape: f32[16,48], index: 3, kind: output, shape index: {}]
  %s4 = sld [smem:[#allocation0]]
  $region30: #{tpu_custom_call.1} parent=0
    _
  %s6 = ssub.s32 1, %s4
  %s7 = scalar_select 0, %s6, %s4
  $region1: #{tpu_custom_call.1} parent=0
    #allocation3 [shape = 'u8[8192]{0}', space=vmem, size = 0x2000, scoped, tag = 'output window, operand 0, single buffered']
    #allocation4 [shape = 's32[1]{0}', space=sflag, size = 0x4, scoped, tag = 'scoped memory for tpu_custom_call.1']
    %8 = vsyncpa [#allocation4], 0
    // Predicated region
    $region2: #{tpu_custom_call.1} parent=1 // pred_check
      _
    $region3: #{tpu_custom_call.1} parent=1 // pred_check_branch
      %10 = sbr.rel (0) target = $region5
    $region4: #{tpu_custom_call.1} parent=1 // pred_region
      _
    $region5: #{tpu_custom_call.1} parent=1 // pred_fallthru
      _
    // Predicated region
    $region6: #{tpu_custom_call.1} parent=1 // pred_check
      _
    $region7: #{tpu_custom_call.1} parent=1 // pred_check_branch
      %12 = sbr.rel (0) target = $region9
    $region8: #{tpu_custom_call.1} parent=1 // pred_region
      _
    $region9: #{tpu_custom_call.1} parent=1 // pred_fallthru
      _
    // Predicated region
    $region10: #{tpu_custom_call.1} parent=1 // pred_check
      _
    $region11: #{tpu_custom_call.1} parent=1 // pred_check_branch
      %14 = sbr.rel (0) target = $region13
    $region12: #{tpu_custom_call.1} parent=1 // pred_region
      _
    $region13: #{tpu_custom_call.1} parent=1 // pred_fallthru
      _
    %p15 = scmp.eq.s32.totalorder 0, 0
    // Predicated region
    $region14: #{tpu_custom_call.1} parent=1 // pred_check
      %p16 = pneg %p15
    $region15: #{tpu_custom_call.1} parent=1 // pred_check_branch
      %18 = sbr.rel (%p16) target = $region17
    $region16: #{tpu_custom_call.1} parent=1 // pred_region
      %vm19 = vcmask 392192
      %20 = vst.msk [vmem:[#allocation2] sm:$0xff] %vm19, 0.0
      %21 = vst.msk [vmem:[#allocation2 + $0x8] sm:$0xff] %vm19, 0.0
    $region17: #{tpu_custom_call.1} parent=1 // pred_fallthru
      _
    %v22 = vld [vmem:[%s0] sm:$0xff]
    %v23 = vld [vmem:[%s0 + $0x8] sm:$0xff]
    %v24 = vld [vmem:[%s1] sm:$0xff]
    %v25 = vld [vmem:[%s1 + $0x8] sm:$0xff]
    %v26 = vld [vmem:[%s1 + $0x10] sm:$0xff]
    %v27 = vld [vmem:[%s1 + $0x18] sm:$0xff]
    %v28 = vld [vmem:[%s1 + $0x20] sm:$0xff]
    %v29 = vld [vmem:[%s1 + $0x28] sm:$0xff]
    %v30 = vld [vmem:[#allocation2] sm:$0xff]
    %v31 = vld [vmem:[#allocation2 + $0x8] sm:$0xff]
    %vm32 = vcmask 261120
    %v34 = vsel %vm32, %v22, 0
    %v37 = vsel %vm32, %v23, 0
    %v40 = vsel %vm32, %v24, 0
    %v43 = vsel %vm32, %v25, 0
    %v46 = vsel %vm32, %v26, 0
    %v49 = vsel %vm32, %v27, 0
    %v52 = vsel %vm32, %v28, 0
    %v55 = vsel %vm32, %v29, 0
    %57 = vmatprep.subr.mxu0 0.0
    %58 = vmatpush1.xpose.msra.mxu0 0.0
    %59 = vmatprep.subr.mxu0 0.0
    %60 = vmatpush1.xpose.msra.mxu0 0.0
    %61 = vmatprep.subr.mxu0 0.0
    %62 = vmatpush1.xpose.msra.mxu0 0.0
    %63 = vmatprep.subr.mxu0 0.0
    %64 = vmatpush1.xpose.msra.mxu0 0.0
    %65 = vmatprep.subr.mxu0 0.0
    %66 = vmatpush1.xpose.msra.mxu0 0.0
    %67 = vmatprep.subr.mxu0 0.0
    %68 = vmatpush1.xpose.msra.mxu0 0.0
    %69 = vmatprep.subr.mxu0 0.0
    %70 = vmatpush1.xpose.msra.mxu0 0.0
    %71 = vmatprep.subr.mxu0 0.0
    %72 = vmatpush1.xpose.msra.mxu0 0.0
    %73 = vmatprep.subr.mxu0 0.0
    %74 = vmatpush1.xpose.msra.mxu0 0.0
    %75 = vmatprep.subr.mxu0 0.0
    %76 = vmatpush1.xpose.msra.mxu0 0.0
    %77 = vmatprep.subr.mxu0 0.0
    %78 = vmatpush1.xpose.msra.mxu0 %v55
    %79 = vmatprep.subr.mxu0 0.0
    %80 = vmatpush1.xpose.msra.mxu0 %v52
    %81 = vmatprep.subr.mxu0 0.0
    %82 = vmatpush1.xpose.msra.mxu0 %v49
    %83 = vmatprep.subr.mxu0 0.0
    %84 = vmatpush1.xpose.msra.mxu0 %v46
    %85 = vmatprep.subr.mxu0 0.0
    %86 = vmatpush1.xpose.msra.mxu0 %v43
    %87 = vmatprep.subr.mxu0 0.0
    %88 = vmatpush1.xpose.msra.mxu0 %v40
    %89 = vmatprep.subr.mxu0 0.0
    %90 = vmatpush2.xpose.msra.mxu0 0.0
    %91 = vmatprep.subr.mxu0 0.0
    %92 = vmatpush2.xpose.msra.mxu0 0.0
    %93 = vmatprep.subr.mxu0 0.0
    %94 = vmatpush2.xpose.msra.mxu0 0.0
    %95 = vmatprep.subr.mxu0 0.0
    %96 = vmatpush2.xpose.msra.mxu0 0.0
    %97 = vmatprep.subr.mxu0 0.0
    %98 = vmatpush2.xpose.msra.mxu0 0.0
    %99 = vmatprep.subr.mxu0 0.0
    %100 = vmatpush2.xpose.msra.mxu0 0.0
    %101 = vmatprep.subr.mxu0 0.0
    %102 = vmatpush2.xpose.msra.mxu0 0.0
    %103 = vmatprep.subr.mxu0 0.0
    %104 = vmatpush2.xpose.msra.mxu0 0.0
    %105 = vmatprep.subr.mxu0 0.0
    %106 = vmatpush2.xpose.msra.mxu0 0.0
    %107 = vmatprep.subr.mxu0 0.0
    %108 = vmatpush2.xpose.msra.mxu0 0.0
    %109 = vmatprep.subr.mxu0 0.0
    %110 = vmatpush2.xpose.msra.mxu0 0.0
    %111 = vmatprep.subr.mxu0 0.0
    %112 = vmatpush2.xpose.msra.mxu0 0.0
    %113 = vmatprep.subr.mxu0 0.0
    %114 = vmatpush2.xpose.msra.mxu0 0.0
    %115 = vmatprep.subr.mxu0 0.0
    %116 = vmatpush2.xpose.msra.mxu0 0.0
    %117 = vmatprep.subr.mxu0 0.0
    %118 = vmatpush2.xpose.msra.mxu0 0.0
    %119 = vmatprep.subr.mxu0 0.0
    %120 = vmatpush2.xpose.msra.mxu0 0.0
    %121 = vmatprep.mubr.f32.mxu0 0.0
    %122 = vmatmul.mubr.f32.gmra.mxu0 %v34
    %v123 = vpop.f32.mrf.mxu0
    %v124 = vadd.f32 0.0, %v123
    %v125 = vpop.f32.mrf.mxu0
    %126 = vmatprep.mubr.f32.mxu0 0.0
    %127 = vmatmul.mubr.f32.gmra.mxu0 %v37
    %v128 = vpop.f32.mrf.mxu0
    %v129 = vadd.f32 0.0, %v128
    %v130 = vpop.f32.mrf.mxu0
    %131 = vdwg.mxu0
    %v132 = vadd.f32 %v30, %v124
    %v133 = vadd.f32 %v31, %v129
    %vm134 = vcmask 392192
    %135 = vst.msk [vmem:[#allocation2] sm:$0xff] %vm134, %v132
    %136 = vst.msk [vmem:[#allocation2 + $0x8] sm:$0xff] %vm134, %v133
    // Predicated region
    $region18: #{tpu_custom_call.1} parent=1 // pred_check
      %p137 = pneg %p15
    $region19: #{tpu_custom_call.1} parent=1 // pred_check_branch
      %139 = sbr.rel (%p137) target = $region21
    $region20: #{tpu_custom_call.1} parent=1 // pred_region
      %v140 = vld [vmem:[#allocation2] sm:$0xff]
      %v141 = vld [vmem:[#allocation2 + $0x8] sm:$0xff]
      %v142 = vld [vmem:[%s2] sm:$0x1]
      %v144 = vlaneseq
      %v145 = vshrl.u32 %v144, 7
      %v146 = vsub.s32 0, %v145
      %v147 = vrot.slane %v142, %v146
      %v149 = vadd.f32 %v140, %v147
      %v150 = vadd.f32 %v141, %v147
      %151 = vst.msk [vmem:[#allocation3] sm:$0xff] %vm134, %v149
      %152 = vst.msk [vmem:[#allocation3 + $0x8] sm:$0xff] %vm134, %v150
    $region21: #{tpu_custom_call.1} parent=1 // pred_fallthru
      _
    // Predicated region
    $region22: #{tpu_custom_call.1} parent=1 // pred_check
      _
    $region23: #{tpu_custom_call.1} parent=1 // pred_check_branch
      %154 = sbr.rel (0) target = $region25
    $region24: #{tpu_custom_call.1} parent=1 // pred_region
      %s156 = ssub.s32 256, 256
      %157 = vsyncadd [#allocation4], %s156
      %s158 = sshll.u32 [#allocation3], 4
      %s159 = int_to_ptr.vmem [resolvable:$true] %s158
      %164 = dma.vmem_to_hbm [thread:$0]  %s159, 256, %s3, [#allocation4], 128, 128, 8
    $region25: #{tpu_custom_call.1} parent=1 // pred_fallthru
      _
    // Predicated region
    $region26: #{tpu_custom_call.1} parent=1 // pred_check
      _
    $region27: #{tpu_custom_call.1} parent=1 // pred_check_branch
      %166 = sbr.rel (0) target = $region29
    $region28: #{tpu_custom_call.1} parent=1 // pred_region
      %167 = dma.done [#allocation4], 256
    $region29: #{tpu_custom_call.1} parent=1 // pred_fallthru
      _
    %168 = vsyncpa [#allocation4], 1

</llo_original>
